<compile_context>
chip_gen: v6e
topology: v6e:2x2x1
jax: 0.10.0
libtpu: 0.0.40
codegen_flags: <defaults>
</compile_context>

<pallas_src>
import math

import jax
import jax.numpy as jnp
from jax.experimental import pallas as pl
from jax.experimental.pallas import tpu as pltpu

# Per-block VMEM budget. in + out, double-buffered => ~4x this resident at
# once, i.e. ~32 MiB, under the explicit 48 MiB scoped-VMEM limit below on all
# of v5e / v6e (128 MiB physical) and v7x (64 MiB physical).
_MAX_BLOCK_BYTES = 8 * 1024 * 1024
_VMEM_LIMIT_BYTES = 48 * 1024 * 1024
# Cap on the lane (last) dim of the flat factorization (multiple of 128).
_MAX_LANE = 4096


def _copy_kernel(x_ref, o_ref):
    # Pure contiguous tile copy: identical block shapes in and out.
    o_ref[...] = x_ref[...]


def _largest_aligned_divisor(n: int, align: int, cap: int):
    """Largest divisor of n that is a multiple of `align` and <= cap, or None."""
    if n % align != 0:
        return None
    best = None
    cap = min(n, max(cap, align))
    d = align
    while d <= cap:
        if n % d == 0:
            best = d
        d += align
    return best


def _row_align(itemsize: int) -> int:
    # Sublane alignment: 8 for 32-bit, 16 for bf16, 32 for int8 (packed sublanes).
    return 8 * max(1, 4 // max(1, itemsize))


def _pick_row_tile(rows: int, lane: int, itemsize: int) -> int:
    """Row tile: multiple of sublane alignment, under the block budget.

    The caller uses pl.cdiv(rows, tile_r), so a partial (masked) last block is
    fine; we never fall back to an unbounded full-rows tile.
    """
    align = _row_align(itemsize)
    if rows <= align:
        return rows  # full extent: legal block dim
    budget_rows = max(align, _MAX_BLOCK_BYTES // max(1, lane * itemsize))
    tile_r = max(align, (budget_rows // align) * align)
    # v7x megacore: keep >= 2 blocks along the (parallel) row axis when rows allow.
    if tile_r >= rows:
        half = -(-rows // 2)                 # ceil(rows / 2)
        tile_r = -(-half // align) * align   # round up to sublane alignment
    return min(tile_r, rows)


def merge_temporal_dim(x_seq: jax.Array, *, materialize: bool = True) -> jax.Array:
    """Pallas equivalent of `x_seq.flatten(0, 1).contiguous()`."""
    T, B = x_seq.shape[0], x_seq.shape[1]
    rest = x_seq.shape[2:]
    rows = T * B
    out_shape = (rows,) + rest

    if not materialize:
        # flatten(0,1) without forcing a fresh buffer: metadata-only in XLA.
        return x_seq.reshape(out_shape)

    F = math.prod(rest) if rest else 1
    N = rows * F
    itemsize = jnp.dtype(x_seq.dtype).itemsize

    # ---- Lane-dense 2D factorization of the flat element stream. ----
    lane = _largest_aligned_divisor(N, 128, _MAX_LANE) if N >= 128 else None
    if lane is not None:
        # Flat (N // lane, lane) view with full-lane blocks: every block is one
        # contiguous, unmasked DMA burst, independent of the original shape.
        copy_rows, copy_cols = N // lane, lane
        tile_f = copy_cols
        tile_r = _pick_row_tile(copy_rows, tile_f, itemsize)
    else:
        # Fallback (N not a multiple of 128): keep the (rows, F) view with a
        # full-F tile when the 8-row slab fits the budget; otherwise split F
        # on a 128-aligned divisor if one exists.
        copy_rows, copy_cols = rows, F
        tile_f = copy_cols
        if _row_align(itemsize) * copy_cols * itemsize > _MAX_BLOCK_BYTES:
            split = _largest_aligned_divisor(copy_cols, 128, _MAX_LANE)
            if split is not None:
                tile_f = split
            # TODO(synk): a huge F with no 128-aligned divisor (and N % 128 != 0)
            # would need pl.Element-style element slicing; not expected here.
        tile_r = _pick_row_tile(copy_rows, tile_f, itemsize)

    x2 = x_seq.reshape(copy_rows, copy_cols)
    grid = (pl.cdiv(copy_rows, tile_r), pl.cdiv(copy_cols, tile_f))

    out2 = pl.pallas_call(
        _copy_kernel,
        out_shape=jax.ShapeDtypeStruct((copy_rows, copy_cols), x_seq.dtype),
        grid_spec=pl.GridSpec(
            grid=grid,
            in_specs=[pl.BlockSpec((tile_r, tile_f), lambda i, j: (i, j))],
            out_specs=pl.BlockSpec((tile_r, tile_f), lambda i, j: (i, j)),
        ),
        compiler_params=pltpu.CompilerParams(
            dimension_semantics=("parallel", "parallel"),
            vmem_limit_bytes=_VMEM_LIMIT_BYTES,
        ),
        cost_estimate=pl.CostEstimate(
            flops=0, transcendentals=0, bytes_accessed=2 * N * itemsize),
    )(x2)

    # Restore the trailing (C, H, W, ...) dims (metadata-only).
    return out2.reshape(out_shape)


if __name__ == "__main__":
    key = jax.random.PRNGKey(0)

    # 1) Time-major batch of NCHW frames (the shape the module implies).
    T, B, C, H, W = 8, 2, 4, 16, 16
    x_seq = jax.random.normal(key, (T, B, C, H, W), dtype=jnp.float32)
    out = jax.block_until_ready(merge_temporal_dim(x_seq))
    ref = x_seq.reshape((T * B, C, H, W))
    assert out.shape == (T * B, C, H, W), out.shape
    assert out.dtype == x_seq.dtype
    assert bool(jnp.array_equal(out, ref))

    # 2) No trailing dims (F == 1): exercises the flat lane-dense path that
    #    previously produced masked, non-lane-dense stores.
    T2, B2 = 8, 16
    x_seq2 = jax.random.normal(jax.random.PRNGKey(1), (T2, B2), dtype=jnp.float32)
    out2 = jax.block_until_ready(merge_temporal_dim(x_seq2))
    ref2 = x_seq2.reshape((T2 * B2,))
    assert out2.shape == (T2 * B2,), out2.shape
    assert bool(jnp.array_equal(out2, ref2))

    print("KERNEL_OK")
</pallas_src>

<mosaic_0001>
module attributes {stable_mosaic.version = 11 : i64} {
  func.func @_copy_kernel(%arg0: i32, %arg1: i32, %arg2: memref<4x4096xf32, #tpu.memory_space<vmem>>, %arg3: memref<4x4096xf32, #tpu.memory_space<vmem>>) attributes {dimension_semantics = [#tpu.dimension_semantics<parallel>, #tpu.dimension_semantics<parallel>], iteration_bounds = array<i64: 1, 1>, scalar_prefetch = 0 : i64, scratch_operands = 0 : i64, tpu.core_type = #tpu.core_type<tc>, window_params = [{transform_indices = @transform_0, window_bounds = array<i64: 4, 4096>}, {transform_indices = @transform_1, window_bounds = array<i64: 4, 4096>}]} {
    %c0 = arith.constant 0 : index
    %c0_0 = arith.constant 0 : index
    %0 = vector.load %arg2[%c0, %c0_0] : memref<4x4096xf32, #tpu.memory_space<vmem>>, vector<4x4096xf32>
    %c0_1 = arith.constant 0 : index
    %c0_2 = arith.constant 0 : index
    %1 = vector.load %arg3[%c0_1, %c0_2] : memref<4x4096xf32, #tpu.memory_space<vmem>>, vector<4x4096xf32>
    tpu.vector_store %arg3[%c0_1, %c0_2], %0 {strides = array<i32>} : memref<4x4096xf32, #tpu.memory_space<vmem>>, vector<4x4096xf32>,
    return
  }
  func.func @transform_0(%arg0: i32, %arg1: i32) -> (i32, i32) {
    %c0_i32 = arith.constant 0 : i32
    return %arg0, %arg1 : i32, i32
  }
  func.func @transform_1(%arg0: i32, %arg1: i32) -> (i32, i32) {
    %c0_i32 = arith.constant 0 : i32
    return %arg0, %arg1 : i32, i32
  }
}

</mosaic_0001>

<llo_original>
// kernel: tpu_custom_call.1
$region0: #{tpu_custom_call.1}
  #allocation0 [shape = 'u32[]', space=smem, size = 0x4, offset = 0x4, fixed_abs, tag = 'smem constant byte address 0x4 - core index']
  #allocation1 [shape = 'u32[144,128]{1,0:T(1,128)}', space=vmem, size = 0x12000, scoped, tag = 'internal scratch']
  %s0 = inlined_call_operand.hbm [shape: f32[4,4096], index: 0, kind: input, shape index: {}]
  %s1 = inlined_call_operand.hbm [shape: f32[4,4096], index: 1, kind: output, shape index: {}]
  %s2 = sld [smem:[#allocation0]]
  $region18: #{tpu_custom_call.1} parent=0
    _
  %s4 = ssub.s32 1, %s2
  %s5 = scalar_select 0, %s4, %s2
  $region1: #{tpu_custom_call.1} parent=0
    #allocation2 [shape = 'u8[65536]{0}', space=vmem, size = 0x10000, scoped, tag = 'input window, operand 0, single buffered']
    #allocation3 [shape = 's32[1]{0}', space=sflag, size = 0x4, scoped, tag = 'scoped memory for tpu_custom_call.1']
    #allocation4 [shape = 's32[1]{0}', space=sflag, size = 0x4, scoped, tag = 'scoped memory for tpu_custom_call.1']
    #allocation5 [shape = 'u8[65536]{0}', space=vmem, size = 0x10000, scoped, tag = 'output window, operand 0, single buffered']
    %6 = vsyncpa [#allocation3], 0
    %7 = vsyncpa [#allocation4], 0
    // Predicated region
    $region2: #{tpu_custom_call.1} parent=1 // pred_check
      _
    $region3: #{tpu_custom_call.1} parent=1 // pred_check_branch
      %9 = sbr.rel (0) target = $region5
    $region4: #{tpu_custom_call.1} parent=1 // pred_region
      %s11 = ssub.s32 2048, 2048
      %12 = vsyncadd [#allocation3], %s11
      %s14 = sshll.u32 [#allocation2], 4
      %s15 = int_to_ptr.vmem [resolvable:$true] %s14
      %17 = dma.hbm_to_vmem [thread:$0]  %s0, 2048, %s15, [#allocation3]
    $region5: #{tpu_custom_call.1} parent=1 // pred_fallthru
      _
    // Predicated region
    $region6: #{tpu_custom_call.1} parent=1 // pred_check
      _
    $region7: #{tpu_custom_call.1} parent=1 // pred_check_branch
      %19 = sbr.rel (0) target = $region9
    $region8: #{tpu_custom_call.1} parent=1 // pred_region
      %20 = dma.done [#allocation3], 2048
    $region9: #{tpu_custom_call.1} parent=1 // pred_fallthru
      _
    %v21 = vld [vmem:[#allocation2] sm:$0xff]
    %v22 = vld [vmem:[#allocation2 + $0x8] sm:$0xff]
    %v23 = vld [vmem:[#allocation2 + $0x10] sm:$0xff]
    %v24 = vld [vmem:[#allocation2 + $0x18] sm:$0xff]
    %v25 = vld [vmem:[#allocation2 + $0x20] sm:$0xff]
    %v26 = vld [vmem:[#allocation2 + $0x28] sm:$0xff]
    %v27 = vld [vmem:[#allocation2 + $0x30] sm:$0xff]
    %v28 = vld [vmem:[#allocation2 + $0x38] sm:$0xff]
    %v29 = vld [vmem:[#allocation2 + $0x40] sm:$0xff]
    %v30 = vld [vmem:[#allocation2 + $0x48] sm:$0xff]
    %v31 = vld [vmem:[#allocation2 + $0x50] sm:$0xff]
    %v32 = vld [vmem:[#allocation2 + $0x58] sm:$0xff]
    %v33 = vld [vmem:[#allocation2 + $0x60] sm:$0xff]
    %v34 = vld [vmem:[#allocation2 + $0x68] sm:$0xff]
    %v35 = vld [vmem:[#allocation2 + $0x70] sm:$0xff]
    %v36 = vld [vmem:[#allocation2 + $0x78] sm:$0xff]
    %37 = vst [vmem:[#allocation5] sm:$0xff] %v21
    %38 = vst [vmem:[#allocation5 + $0x8] sm:$0xff] %v22
    %39 = vst [vmem:[#allocation5 + $0x10] sm:$0xff] %v23
    %40 = vst [vmem:[#allocation5 + $0x18] sm:$0xff] %v24
    %41 = vst [vmem:[#allocation5 + $0x20] sm:$0xff] %v25
    %42 = vst [vmem:[#allocation5 + $0x28] sm:$0xff] %v26
    %43 = vst [vmem:[#allocation5 + $0x30] sm:$0xff] %v27
    %44 = vst [vmem:[#allocation5 + $0x38] sm:$0xff] %v28
    %45 = vst [vmem:[#allocation5 + $0x40] sm:$0xff] %v29
    %46 = vst [vmem:[#allocation5 + $0x48] sm:$0xff] %v30
    %47 = vst [vmem:[#allocation5 + $0x50] sm:$0xff] %v31
    %48 = vst [vmem:[#allocation5 + $0x58] sm:$0xff] %v32
    %49 = vst [vmem:[#allocation5 + $0x60] sm:$0xff] %v33
    %50 = vst [vmem:[#allocation5 + $0x68] sm:$0xff] %v34
    %51 = vst [vmem:[#allocation5 + $0x70] sm:$0xff] %v35
    %52 = vst [vmem:[#allocation5 + $0x78] sm:$0xff] %v36
    // Predicated region
    $region10: #{tpu_custom_call.1} parent=1 // pred_check
      _
    $region11: #{tpu_custom_call.1} parent=1 // pred_check_branch
      %54 = sbr.rel (0) target = $region13
    $region12: #{tpu_custom_call.1} parent=1 // pred_region
      %s56 = ssub.s32 2048, 2048
      %57 = vsyncadd [#allocation4], %s56
      %s59 = sshll.u32 [#allocation5], 4
      %s60 = int_to_ptr.vmem [resolvable:$true] %s59
      %62 = dma.vmem_to_hbm [thread:$0]  %s60, 2048, %s1, [#allocation4]
    $region13: #{tpu_custom_call.1} parent=1 // pred_fallthru
      _
    // Predicated region
    $region14: #{tpu_custom_call.1} parent=1 // pred_check
      _
    $region15: #{tpu_custom_call.1} parent=1 // pred_check_branch
      %64 = sbr.rel (0) target = $region17
    $region16: #{tpu_custom_call.1} parent=1 // pred_region
      %65 = dma.done [#allocation4], 2048
    $region17: #{tpu_custom_call.1} parent=1 // pred_fallthru
      _
    %66 = vsyncpa [#allocation3], 1
    %67 = vsyncpa [#allocation4], 1

</llo_original>
